<compile_context>
chip_gen: v6e
topology: v6e:2x2x1
jax: 0.10.0
libtpu: 0.0.40
codegen_flags: <defaults>
</compile_context>

<pallas_src>
import jax
import jax.numpy as jnp
from jax import lax
from jax.experimental import pallas as pl
from jax.experimental.pallas import tpu as pltpu


def linears_head_kernel(x_ref, w1t_ref, b1_ref, w2_ref, b2_ref, o_ref):
    # x_ref:   (TB, IN)  native dtype (f32 / bf16); cast to bf16 on-chip
    # w1t_ref: (H, IN)   bf16   first weight, pre-transposed (resident)
    # b1_ref:  (H, 1)    f32
    # w2_ref:  (1, H)    f32    second weight, pre-transposed row
    # b2_ref:  (1, 1)    f32    SMEM scalar
    # o_ref:   (1, TB)   f32    lane-dense output row for this batch tile
    x_bf = x_ref[...].astype(jnp.bfloat16)
    # h_T[h, t] = sum_i w1[i, h] * x[t, i]   (batch stays on lanes)
    h_t = lax.dot_general(
        w1t_ref[...], x_bf,
        dimension_numbers=(((1,), (1,)), ((), ())),
        preferred_element_type=jnp.float32,
    )                                              # (H, TB) f32
    h_t = jnp.maximum(h_t + b1_ref[...], 0.0)      # bias + ReLU (VPU)
    # Second layer on the MXU: (1, H) @ (H, TB) -> (1, TB), f32 accumulate.
    y = lax.dot_general(
        w2_ref[...], h_t,
        dimension_numbers=(((1,), (0,)), ((), ())),
        preferred_element_type=jnp.float32,
    ) + b2_ref[0, 0]
    o_ref[...] = y.astype(o_ref.dtype)


def prepare_linears_head_params(w1, b1, w2, b2):
    """One-time parameter prep (do this at load time, outside the hot path)."""
    in_feat, hidden = w1.shape
    return (
        jnp.transpose(w1).astype(jnp.bfloat16),        # (H, IN) bf16
        b1.reshape(hidden, 1).astype(jnp.float32),     # (H, 1)
        w2.reshape(1, hidden).astype(jnp.float32),     # (1, H)  == w2^T
        b2.reshape(1, 1).astype(jnp.float32),          # (1, 1)  SMEM scalar
    )


def _batch_tile(B, block_batch):
    """Lane-aligned batch tile; >= 2 grid steps whenever B > 128."""
    if B <= 128:
        return B                                   # single block == full batch dim
    tb = max(128, (min(block_batch, B) // 128) * 128)
    if tb >= B:
        # Split into (at least) two roughly-equal blocks so both v7x TensorCores
        # get work and input DMA / compute can pipeline.
        tb = max(128, pl.cdiv(pl.cdiv(B, 2), 128) * 128)
    return tb


def linears_head_prepared(x, params, *, block_batch=8192):
    """relu(x @ w1 + b1) @ w2 + b2 with pre-prepared params. Returns [B, 1] f32."""
    w1_t, b1_col, w2_row, b2_sc = params
    B, in_feat = x.shape
    hidden = w1_t.shape[0]

    tb = _batch_tile(B, block_batch)
    grid = (pl.cdiv(B, tb),)          # last block may be partial; Pallas masks OOB writes

    out_row = pl.pallas_call(
        linears_head_kernel,
        out_shape=jax.ShapeDtypeStruct((1, B), jnp.float32),
        grid_spec=pltpu.PrefetchScalarGridSpec(
            num_scalar_prefetch=0,
            grid=grid,
            in_specs=[
                pl.BlockSpec((tb, in_feat), lambda i: (i, 0)),       # x batch tile (streamed)
                pl.BlockSpec((hidden, in_feat), lambda i: (0, 0)),   # w1^T (resident)
                pl.BlockSpec((hidden, 1), lambda i: (0, 0)),         # b1
                pl.BlockSpec((1, hidden), lambda i: (0, 0)),         # w2^T row
                pl.BlockSpec(memory_space=pltpu.MemorySpace.SMEM),   # b2 scalar
            ],
            out_specs=pl.BlockSpec((1, tb), lambda i: (0, i)),       # lane-dense row
        ),
        compiler_params=pltpu.CompilerParams(
            dimension_semantics=("parallel",),
            # Headroom for large tiles (x is double-buffered; tile is lane-padded
            # 64->128 in VMEM).  8192-row f32 tiles use ~10 MiB; this keeps v5e's
            # 16 MiB scoped default from constraining larger block_batch values.
            vmem_limit_bytes=32 * 1024 * 1024,
        ),
    )(x, w1_t, b1_col, w2_row, b2_sc)

    # (1, B) -> (B, 1) is a flat-order-preserving reshape.
    return out_row.reshape(B, 1)


def linears_head(x, w1, b1, w2, b2, *, block_batch=8192):
    """Convenience wrapper that prepares params inline (prefer hoisting prep)."""
    return linears_head_prepared(
        x, prepare_linears_head_params(w1, b1, w2, b2), block_batch=block_batch
    )


if __name__ == "__main__":
    # config.hidden_size = 32, input_num = 2  ->  in_features = 64
    hidden = 32
    input_num = 2
    in_feat = input_num * hidden
    batch = 200   # ragged: exercises partial-last-block masking and a 2-step grid

    key = jax.random.PRNGKey(0)
    kx, kw1, kb1, kw2, kb2 = jax.random.split(key, 5)

    x = jax.random.normal(kx, (batch, in_feat), dtype=jnp.float32)
    s1 = 1.0 / jnp.sqrt(in_feat)
    w1 = jax.random.uniform(kw1, (in_feat, hidden), jnp.float32, -s1, s1)  # [in, out]
    b1 = jax.random.uniform(kb1, (hidden,), jnp.float32, -s1, s1)
    s2 = 1.0 / jnp.sqrt(hidden)
    w2 = jax.random.uniform(kw2, (hidden, 1), jnp.float32, -s2, s2)        # [in, out]
    b2 = jax.random.uniform(kb2, (1,), jnp.float32, -s2, s2)

    # Hoisted parameter prep (done once); x is passed in its native dtype and
    # cast to bf16 inside the kernel.
    params = prepare_linears_head_params(w1, b1, w2, b2)
    out = linears_head_prepared(x, params)
    out = jax.block_until_ready(out)

    # Pure-JAX reference with the same bf16-rounded operands (kernel accumulates in f32).
    x_r = x.astype(jnp.bfloat16).astype(jnp.float32)
    w1_r = w1.astype(jnp.bfloat16).astype(jnp.float32)
    ref = jnp.maximum(x_r @ w1_r + b1, 0.0) @ w2 + b2

    assert out.shape == (batch, 1)
    assert jnp.allclose(out, ref, atol=2e-2, rtol=2e-2), "mismatch vs reference"

    print("KERNEL_OK")
</pallas_src>

<mosaic_0001>
module attributes {stable_mosaic.version = 11 : i64} {
  func.func @linears_head_kernel(%arg0: i32, %arg1: memref<128x64xf32, #tpu.memory_space<vmem>>, %arg2: memref<32x64xbf16, #tpu.memory_space<vmem>>, %arg3: memref<32x1xf32, #tpu.memory_space<vmem>>, %arg4: memref<1x32xf32, #tpu.memory_space<vmem>>, %arg5: memref<1x1xf32, #tpu.memory_space<smem>>, %arg6: memref<1x128xf32, #tpu.memory_space<vmem>>) attributes {dimension_semantics = [#tpu.dimension_semantics<parallel>], iteration_bounds = array<i64: 2>, scalar_prefetch = 0 : i64, scratch_operands = 0 : i64, tpu.core_type = #tpu.core_type<tc>, window_params = [{transform_indices = @transform_0, window_bounds = array<i64: 128, 64>}, {pipeline_mode = #tpu.pipeline_mode<synchronous>, transform_indices = @transform_1, window_bounds = array<i64: 32, 64>}, {pipeline_mode = #tpu.pipeline_mode<synchronous>, transform_indices = @transform_2, window_bounds = array<i64: 32, 1>}, {pipeline_mode = #tpu.pipeline_mode<synchronous>, transform_indices = @transform_3, window_bounds = array<i64: 1, 32>}, {transform_indices = @transform_4, window_bounds = array<i64: 1, 1>}, {transform_indices = @transform_5, window_bounds = array<i64: 1, 128>}]} {
    %c0 = arith.constant 0 : index
    %c0_0 = arith.constant 0 : index
    %0 = vector.load %arg1[%c0, %c0_0] : memref<128x64xf32, #tpu.memory_space<vmem>>, vector<128x64xf32>
    %1 = arith.truncf %0 : vector<128x64xf32> to vector<128x64xbf16>
    %c0_1 = arith.constant 0 : index
    %c0_2 = arith.constant 0 : index
    %2 = vector.load %arg2[%c0_1, %c0_2] : memref<32x64xbf16, #tpu.memory_space<vmem>>, vector<32x64xbf16>
    %cst = arith.constant dense<0.000000e+00> : vector<32x128xf32>
    %3 = tpu.matmul %2, %1, %cst {dimension_numbers = #tpu.dot_dimension_numbers<[1], [1], [0], [0], [0, 0, 1, 0], [], []>} : vector<32x64xbf16>, vector<128x64xbf16>, vector<32x128xf32> -> vector<32x128xf32>
    %c0_3 = arith.constant 0 : index
    %c0_4 = arith.constant 0 : index
    %4 = vector.load %arg3[%c0_3, %c0_4] : memref<32x1xf32, #tpu.memory_space<vmem>>, vector<32x1xf32>
    %5 = vector.broadcast %4 : vector<32x1xf32> to vector<32x128xf32>
    %6 = arith.addf %3, %5 : vector<32x128xf32>
    %cst_5 = arith.constant 0.000000e+00 : f32
    %7 = vector.broadcast %cst_5 : f32 to vector<32x128xf32>
    %8 = arith.maximumf %6, %7 : vector<32x128xf32>
    %c0_6 = arith.constant 0 : index
    %c0_7 = arith.constant 0 : index
    %9 = vector.load %arg4[%c0_6, %c0_7] : memref<1x32xf32, #tpu.memory_space<vmem>>, vector<1x32xf32>
    %cst_8 = arith.constant dense<0.000000e+00> : vector<1x128xf32>
    %10 = tpu.matmul %9, %8, %cst_8 {dimension_numbers = #tpu.dot_dimension_numbers<[1], [0], [0], [1], [0, 0, 1, 1], [], []>} : vector<1x32xf32>, vector<32x128xf32>, vector<1x128xf32> -> vector<1x128xf32>
    %c0_9 = arith.constant 0 : index
    %c0_10 = arith.constant 0 : index
    %11 = memref.load %arg5[%c0_9, %c0_10] : memref<1x1xf32, #tpu.memory_space<smem>>
    %12 = vector.broadcast %11 : f32 to vector<1x128xf32>
    %13 = arith.addf %10, %12 : vector<1x128xf32>
    %c0_11 = arith.constant 0 : index
    %c0_12 = arith.constant 0 : index
    %14 = vector.load %arg6[%c0_11, %c0_12] : memref<1x128xf32, #tpu.memory_space<vmem>>, vector<1x128xf32>
    tpu.vector_store %arg6[%c0_11, %c0_12], %13 {strides = array<i32>} : memref<1x128xf32, #tpu.memory_space<vmem>>, vector<1x128xf32>,
    return
  }
  func.func @transform_0(%arg0: i32) -> (i32, i32) {
    %c0_i32 = arith.constant 0 : i32
    %c0_i32_0 = arith.constant 0 : i32
    return %arg0, %c0_i32 : i32, i32
  }
  func.func @transform_1(%arg0: i32) -> (i32, i32) {
    %c0_i32 = arith.constant 0 : i32
    %c0_i32_0 = arith.constant 0 : i32
    %c0_i32_1 = arith.constant 0 : i32
    return %c0_i32, %c0_i32_0 : i32, i32
  }
  func.func @transform_2(%arg0: i32) -> (i32, i32) {
    %c0_i32 = arith.constant 0 : i32
    %c0_i32_0 = arith.constant 0 : i32
    %c0_i32_1 = arith.constant 0 : i32
    return %c0_i32, %c0_i32_0 : i32, i32
  }
  func.func @transform_3(%arg0: i32) -> (i32, i32) {
    %c0_i32 = arith.constant 0 : i32
    %c0_i32_0 = arith.constant 0 : i32
    %c0_i32_1 = arith.constant 0 : i32
    return %c0_i32, %c0_i32_0 : i32, i32
  }
  func.func @transform_4(%arg0: i32) -> (i32, i32) {
    %c0_i32 = arith.constant 0 : i32
    %c0_i32_0 = arith.constant 0 : i32
    %c0_i32_1 = arith.constant 0 : i32
    return %c0_i32, %c0_i32_0 : i32, i32
  }
  func.func @transform_5(%arg0: i32) -> (i32, i32) {
    %c0_i32 = arith.constant 0 : i32
    %c0_i32_0 = arith.constant 0 : i32
    return %c0_i32, %arg0 : i32, i32
  }
}

</mosaic_0001>

<llo_original>
// kernel: tpu_custom_call.1
$region0: #{tpu_custom_call.1}
  #allocation0 [shape = 'u32[]', space=smem, size = 0x4, offset = 0x4, fixed_abs, tag = 'smem constant byte address 0x4 - core index']
  #allocation1 [shape = 'u32[144,128]{1,0:T(1,128)}', space=vmem, size = 0x12000, scoped, tag = 'internal scratch']
  #allocation2 [shape = 'f32[1,1]{1,0:T(1,128)S(6)}', space=smem, size = 0x200, scoped, tag = 'scoped memory for tpu_custom_call.1']
  %s0 = inlined_call_operand.vmem [shape: f32[200,64], index: 0, kind: input, shape index: {}]
  %s1 = inlined_call_operand.vmem [shape: bf16[32,64], index: 1, kind: input, shape index: {}]
  %s2 = inlined_call_operand.vmem [shape: f32[32,1], index: 2, kind: input, shape index: {}]
  %s3 = inlined_call_operand.vmem [shape: f32[1,32], index: 3, kind: input, shape index: {}]
  %s4 = inlined_call_operand.<no memory space> [shape: f32[1,1], index: 4, kind: input, shape index: {}]
  %s5 = inlined_call_operand.hbm [shape: f32[1,200], index: 5, kind: output, shape index: {}]
  %s6 = sld [smem:[#allocation0]]
  $region53: #{tpu_custom_call.1} parent=0
    _
  %s8 = ssub.s32 1, %s6
  %s9 = scalar_select 0, %s8, %s6
  %10 = sst [smem:[#allocation2]] %s4
  $region1: #{tpu_custom_call.1} parent=0
    #allocation3 [shape = 'u8[1024]{0}', space=vmem, size = 0x400, scoped, tag = 'output window, operand 0']
    #allocation4 [shape = 's32[2]{0}', space=sflag, size = 0x8, scoped, tag = 'scoped memory for tpu_custom_call.1']
    %11 = vsyncpa [#allocation4], 0
    %s12 = scalar_lea.sflag [#allocation4], 1
    %13 = vsyncpa %s12, 0
    loop: start=0, step=1, limit=4
    $region2: #{tpu_custom_call.1} parent=1 // loop_pre_header
      _
    $region3: #{tpu_custom_call.1} parent=1 // loop_header
      %s15 = sphi 0, %s19
      %p16 = scmp.ge.s32.totalorder %s15, 4
      %s25 = sphi 0, %s27
      %s28 = sphi 0, %s25
      %s29 = sphi 0, %s28
      %s45 = sphi 0, %s29
      %s49 = sphi 0, %s49
      %s51 = sphi 0, %s49
      %s52 = sphi 0, %s51
      %s66 = sphi 0, %s52
      %s70 = sphi 0, %s70
      %s72 = sphi 0, %s70
      %s73 = sphi 0, %s72
      %s87 = sphi 0, %s73
      %s91 = sphi 0, %s91
      %s93 = sphi 0, %s91
      %s94 = sphi 0, %s93
      %s108 = sphi 0, %s94
      %s112 = sphi 0, %s112
      %s114 = sphi 0, %s112
      %s115 = sphi 0, %s114
      %s129 = sphi 0, %s115
      %s135 = sphi 0, %s137
      %s138 = sphi 0, %s135
      %s139 = sphi 0, %s138
      %s155 = sphi 0, %s139
    $region4: #{tpu_custom_call.1} parent=1 // loop_header_branch
      %18 = sbr.rel (%p16) target = $region8
    $region5: #{tpu_custom_call.1} parent=1 // loop_body
      %s20 = ssub.s32 %s15, 1
      %s21 = ssub.s32 %s15, 2
      %s22 = sadd.s32 %s15, 1
      %s23 = ssub.s32 %s15, %s22
      %p24 = scmp.eq.s32.totalorder %s23, 0
      %s26 = sadd.s32 %s25, 1
      %s27 = scalar_select %p24, %s25, %s26
      %p30 = pneg %p24
      %p31 = scmp.eq.s32.totalorder %s15, 1
      %p32 = por %p30, %p31
      %p33 = scmp.ne.s32.totalorder %s25, %s28
      %p34 = scmp.eq.s32.totalorder %s15, 0
      %p35 = por %p33, %p34
      %p36 = scmp.ne.s32.totalorder %s25, %s28
      %p37 = scmp.eq.s32.totalorder %s20, 1
      %p38 = por %p36, %p37
      %p39 = scmp.ne.s32.totalorder %s28, %s29
      %p40 = scmp.eq.s32.totalorder %s20, 0
      %p41 = por %p39, %p40
      %p42 = scmp.ne.s32.totalorder %s28, %s29
      %p43 = scmp.eq.s32.totalorder %s21, 1
      %p44 = por %p42, %p43
      %p46 = scmp.ne.s32.totalorder %s29, %s45
      %p47 = scmp.eq.s32.totalorder %s21, 0
      %p48 = por %p46, %p47
      %s50 = sadd.s32 %s49, 1
      %p53 = scmp.eq.s32.totalorder %s15, 1
      %p54 = scmp.ne.s32.totalorder %s49, %s51
      %p55 = scmp.eq.s32.totalorder %s15, 0
      %p56 = por %p54, %p55
      %p57 = scmp.ne.s32.totalorder %s49, %s51
      %p58 = scmp.eq.s32.totalorder %s20, 1
      %p59 = por %p57, %p58
      %p60 = scmp.ne.s32.totalorder %s51, %s52
      %p61 = scmp.eq.s32.totalorder %s20, 0
      %p62 = por %p60, %p61
      %p63 = scmp.ne.s32.totalorder %s51, %s52
      %p64 = scmp.eq.s32.totalorder %s21, 1
      %p65 = por %p63, %p64
      %p67 = scmp.ne.s32.totalorder %s52, %s66
      %p68 = scmp.eq.s32.totalorder %s21, 0
      %p69 = por %p67, %p68
      %s71 = sadd.s32 %s70, 1
      %p74 = scmp.eq.s32.totalorder %s15, 1
      %p75 = scmp.ne.s32.totalorder %s70, %s72
      %p76 = scmp.eq.s32.totalorder %s15, 0
      %p77 = por %p75, %p76
      %p78 = scmp.ne.s32.totalorder %s70, %s72
      %p79 = scmp.eq.s32.totalorder %s20, 1
      %p80 = por %p78, %p79
      %p81 = scmp.ne.s32.totalorder %s72, %s73
      %p82 = scmp.eq.s32.totalorder %s20, 0
      %p83 = por %p81, %p82
      %p84 = scmp.ne.s32.totalorder %s72, %s73
      %p85 = scmp.eq.s32.totalorder %s21, 1
      %p86 = por %p84, %p85
      %p88 = scmp.ne.s32.totalorder %s73, %s87
      %p89 = scmp.eq.s32.totalorder %s21, 0
      %p90 = por %p88, %p89
      %s92 = sadd.s32 %s91, 1
      %p95 = scmp.eq.s32.totalorder %s15, 1
      %p96 = scmp.ne.s32.totalorder %s91, %s93
      %p97 = scmp.eq.s32.totalorder %s15, 0
      %p98 = por %p96, %p97
      %p99 = scmp.ne.s32.totalorder %s91, %s93
      %p100 = scmp.eq.s32.totalorder %s20, 1
      %p101 = por %p99, %p100
      %p102 = scmp.ne.s32.totalorder %s93, %s94
      %p103 = scmp.eq.s32.totalorder %s20, 0
      %p104 = por %p102, %p103
      %p105 = scmp.ne.s32.totalorder %s93, %s94
      %p106 = scmp.eq.s32.totalorder %s21, 1
      %p107 = por %p105, %p106
      %p109 = scmp.ne.s32.totalorder %s94, %s108
      %p110 = scmp.eq.s32.totalorder %s21, 0
      %p111 = por %p109, %p110
      %s113 = sadd.s32 %s112, 1
      %p116 = scmp.eq.s32.totalorder %s15, 1
      %p117 = scmp.ne.s32.totalorder %s112, %s114
      %p118 = scmp.eq.s32.totalorder %s15, 0
      %p119 = por %p117, %p118
      %p120 = scmp.ne.s32.totalorder %s112, %s114
      %p121 = scmp.eq.s32.totalorder %s20, 1
      %p122 = por %p120, %p121
      %p123 = scmp.ne.s32.totalorder %s114, %s115
      %p124 = scmp.eq.s32.totalorder %s20, 0
      %p125 = por %p123, %p124
      %p126 = scmp.ne.s32.totalorder %s114, %s115
      %p127 = scmp.eq.s32.totalorder %s21, 1
      %p128 = por %p126, %p127
      %p130 = scmp.ne.s32.totalorder %s115, %s129
      %p131 = scmp.eq.s32.totalorder %s21, 0
      %p132 = por %p130, %p131
      %s133 = ssub.s32 %s15, %s22
      %p134 = scmp.eq.s32.totalorder %s133, 0
      %s136 = sadd.s32 %s135, 1
      %s137 = scalar_select %p134, %s135, %s136
      %p140 = pneg %p134
      %p141 = scmp.eq.s32.totalorder %s15, 1
      %p142 = por %p140, %p141
      %p143 = scmp.ne.s32.totalorder %s135, %s138
      %p144 = scmp.eq.s32.totalorder %s15, 0
      %p145 = por %p143, %p144
      %p146 = scmp.ne.s32.totalorder %s135, %s138
      %p147 = scmp.eq.s32.totalorder %s20, 1
      %p148 = por %p146, %p147
      %p149 = scmp.ne.s32.totalorder %s138, %s139
      %p150 = scmp.eq.s32.totalorder %s20, 0
      %p151 = por %p149, %p150
      %p152 = scmp.ne.s32.totalorder %s138, %s139
      %p153 = scmp.eq.s32.totalorder %s21, 1
      %p154 = por %p152, %p153
      %p156 = scmp.ne.s32.totalorder %s139, %s155
      %p157 = scmp.eq.s32.totalorder %s21, 0
      %p158 = por %p156, %p157
      %p159 = scmp.le.s32.totalorder 1, %s15
      %p160 = scmp.lt.s32.totalorder %s15, 3
      %p161 = pnand %p159, %p160
      %p162 = pneg %p161
      // Predicated region
      $region9: #{tpu_custom_call.1} parent=5 // pred_check
        _
      $region10: #{tpu_custom_call.1} parent=5 // pred_check_branch
        %164 = sbr.rel (%p161) target = $region12
      $region11: #{tpu_custom_call.1} parent=5 // pred_region
        %s165 = ssub.s32 %s15, 1
        // Predicated region
        $region13: #{tpu_custom_call.1} parent=11 // pred_check
          %p166 = pneg %p62
        $region14: #{tpu_custom_call.1} parent=11 // pred_check_branch
          %168 = sbr.rel (%p166) target = $region16
        $region15: #{tpu_custom_call.1} parent=11 // pred_region
          _
        $region16: #{tpu_custom_call.1} parent=11 // pred_fallthru
          _
        // Predicated region
        $region17: #{tpu_custom_call.1} parent=11 // pred_check
          %p169 = pneg %p83
        $region18: #{tpu_custom_call.1} parent=11 // pred_check_branch
          %171 = sbr.rel (%p169) target = $region20
        $region19: #{tpu_custom_call.1} parent=11 // pred_region
          _
        $region20: #{tpu_custom_call.1} parent=11 // pred_fallthru
          _
        // Predicated region
        $region21: #{tpu_custom_call.1} parent=11 // pred_check
          %p172 = pneg %p104
        $region22: #{tpu_custom_call.1} parent=11 // pred_check_branch
          %174 = sbr.rel (%p172) target = $region24
        $region23: #{tpu_custom_call.1} parent=11 // pred_region
          _
        $region24: #{tpu_custom_call.1} parent=11 // pred_fallthru
          _
        // Predicated region
        $region25: #{tpu_custom_call.1} parent=11 // pred_check
          %p175 = pneg %p125
        $region26: #{tpu_custom_call.1} parent=11 // pred_check_branch
          %177 = sbr.rel (%p175) target = $region28
        $region27: #{tpu_custom_call.1} parent=11 // pred_region
          _
        $region28: #{tpu_custom_call.1} parent=11 // pred_fallthru
          _
      $region12: #{tpu_custom_call.1} parent=5 // pred_fallthru
        _
      %p178 = scmp.lt.s32.totalorder %s15, 2
      // Predicated region
      $region29: #{tpu_custom_call.1} parent=5 // pred_check
        %p179 = pneg %p178
      $region30: #{tpu_custom_call.1} parent=5 // pred_check_branch
        %181 = sbr.rel (%p179) target = $region32
      $region31: #{tpu_custom_call.1} parent=5 // pred_region
        // Predicated region
        $region33: #{tpu_custom_call.1} parent=31 // pred_check
          %p182 = pneg %p35
        $region34: #{tpu_custom_call.1} parent=31 // pred_check_branch
          %184 = sbr.rel (%p182) target = $region36
        $region35: #{tpu_custom_call.1} parent=31 // pred_region
          %s185 = smul.u32 16, %s15
          %s186 = ssub.s32 25, %s185
          %p187 = scmp.lt.s32.totalorder %s186, 16
          %s188 = scalar_select %p187, %s186, 16
          %s189 = smul.u32 128, %s188
          %p190 = scmp.lt.s32.totalorder %s185, 24
          %s191 = scalar_select %p190, %s185, 24
          %s192 = smul.addr %s191, 8
          %s193 = scalar_lea.vmem %s0, %s192
          %s194 = smul.u32 16, %s15
          %s195 = ssub.s32 25, %s194
          %p196 = scmp.lt.s32.totalorder %s195, 16
          %s197 = scalar_select %p196, %s195, 16
          %s198 = smul.u32 128, %s197
        $region36: #{tpu_custom_call.1} parent=31 // pred_fallthru
          _
      $region32: #{tpu_custom_call.1} parent=5 // pred_fallthru
        _
      %p199 = scmp.le.s32.totalorder 1, %s15
      %p200 = scmp.lt.s32.totalorder %s15, 3
      %p201 = pnand %p199, %p200
      %p202 = pneg %p201
      // Predicated region
      $region37: #{tpu_custom_call.1} parent=5 // pred_check
        _
      $region38: #{tpu_custom_call.1} parent=5 // pred_check_branch
        %204 = sbr.rel (%p201) target = $region40
      $region39: #{tpu_custom_call.1} parent=5 // pred_region
        %s205 = ssub.s32 %s15, 1
        %s206 = smul.u32 16, %s20
        %s207 = ssub.s32 25, %s206
        %p208 = scmp.lt.s32.totalorder %s207, 16
        %s209 = scalar_select %p208, %s207, 16
        %s210 = smul.u32 128, %s209
        %p211 = scmp.lt.s32.totalorder %s206, 24
        %s212 = scalar_select %p211, %s206, 24
        %s213 = smul.addr %s212, 8
        %s214 = scalar_lea.vmem %s0, %s213
        %p215 = pneg %p41
        %p216 = pneg %p38
        %p217 = pneg %p62
        %p218 = pneg %p59
        %p219 = pneg %p83
        %p220 = pneg %p80
        %p221 = pneg %p104
        %p222 = pneg %p101
        %p223 = pneg %p125
        %p224 = pneg %p122
        %p225 = pneg %p151
        %p226 = pneg %p148
        %s227 = sand.u32 %s138, 1
        %s228 = scalar_lea.sflag [#allocation4], %s227
        %s229 = sand.u32 %s138, 1
        %s230 = scalar_lea.vmem [#allocation3], %s229
        %s231 = smul.u32 16, %s20
        %s232 = ssub.s32 25, %s231
        %p233 = scmp.lt.s32.totalorder %s232, 16
        %s234 = scalar_select %p233, %s232, 16
        %s235 = smul.u32 128, %s234
        %p236 = scmp.lt.s32.totalorder %s231, 24
        %s237 = scalar_select %p236, %s231, 24
        %s238 = smul.addr %s237, 8
        %s239 = scalar_lea.vmem %s0, %s238
        %s240 = smul.u32 16, %s20
        %s241 = ssub.s32 25, %s240
        %p242 = scmp.lt.s32.totalorder %s241, 16
        %s243 = scalar_select %p242, %s241, 16
        %s244 = smul.u32 128, %s243
        %v246 = vld [vmem:[%s239] sm:$0xff]
        %v247 = vld [vmem:[%s239 + $0x8] sm:$0xff]
        %v248 = vld [vmem:[%s239 + $0x10] sm:$0xff]
        %v249 = vld [vmem:[%s239 + $0x18] sm:$0xff]
        %v250 = vld [vmem:[%s239 + $0x20] sm:$0xff]
        %v251 = vld [vmem:[%s239 + $0x28] sm:$0xff]
        %v252 = vld [vmem:[%s239 + $0x30] sm:$0xff]
        %v253 = vld [vmem:[%s239 + $0x38] sm:$0xff]
        %v254 = vld [vmem:[%s239 + $0x40] sm:$0xff]
        %v255 = vld [vmem:[%s239 + $0x48] sm:$0xff]
        %v256 = vld [vmem:[%s239 + $0x50] sm:$0xff]
        %v257 = vld [vmem:[%s239 + $0x58] sm:$0xff]
        %v258 = vld [vmem:[%s239 + $0x60] sm:$0xff]
        %v259 = vld [vmem:[%s239 + $0x68] sm:$0xff]
        %v260 = vld [vmem:[%s239 + $0x70] sm:$0xff]
        %v261 = vld [vmem:[%s239 + $0x78] sm:$0xff]
        %v262 = vpack.c.bf16 %v247, %v246
        %v263 = vpack.c.bf16 %v249, %v248
        %v264 = vpack.c.bf16 %v251, %v250
        %v265 = vpack.c.bf16 %v253, %v252
        %v266 = vpack.c.bf16 %v255, %v254
        %v267 = vpack.c.bf16 %v257, %v256
        %v268 = vpack.c.bf16 %v259, %v258
        %v269 = vpack.c.bf16 %v261, %v260
        %v270 = vld [vmem:[%s1] sm:$0xf]
        %v271 = vld [vmem:[%s1 + $0x4] sm:$0xf]
        %v272 = vld [vmem:[%s1 + $0x8] sm:$0xf]
        %v273 = vld [vmem:[%s1 + $0xc] sm:$0xf]
        %v274 = vld [vmem:[%s2] sm:$0xff]
        %v275 = vld [vmem:[%s2 + $0x8] sm:$0xff]
        %v276 = vld [vmem:[%s2 + $0x10] sm:$0xff]
        %v277 = vld [vmem:[%s2 + $0x18] sm:$0xff]
        %279 = vset.pattern.permute.xlu0 0
        %280 = vperm.xlu0 %279, %v274
        %v281 = vpop.permute.xlu0 %280
        %284 = vset.pattern.permute.xlu0 0
        %285 = vperm.xlu0 %284, %v275
        %v286 = vpop.permute.xlu0 %285
        %289 = vset.pattern.permute.xlu0 0
        %290 = vperm.xlu0 %289, %v276
        %v291 = vpop.permute.xlu0 %290
        %294 = vset.pattern.permute.xlu0 0
        %295 = vperm.xlu0 %294, %v277
        %v296 = vpop.permute.xlu0 %295
        %v302 = vunpack.c.l.b16 %v270
        %v303 = vunpack.c.l.b16 %v271
        %v304 = vunpack.c.l.b16 %v272
        %v305 = vunpack.c.l.b16 %v273
        %v306 = vpack.c.b16 %v303, %v302
        %v307 = vpack.c.b16 %v305, %v304
        %vm308 = vcmask 523264
        %v310 = vsel %vm308, %v306, 0
        %v313 = vsel %vm308, %v307, 0
        %v316 = vsel %vm308, %v262, 0
        %v319 = vsel %vm308, %v263, 0
        %v322 = vsel %vm308, %v264, 0
        %v325 = vsel %vm308, %v265, 0
        %v328 = vsel %vm308, %v266, 0
        %v331 = vsel %vm308, %v267, 0
        %v334 = vsel %vm308, %v268, 0
        %v337 = vsel %vm308, %v269, 0
        %339 = vmatprep.subr.bf16.mxu0 0
        %340 = vmatpush1.bf16.xpose.msra.mxu0 %v337
        %341 = vmatprep.subr.bf16.mxu0 0
        %342 = vmatpush1.bf16.xpose.msra.mxu0 %v334
        %343 = vmatprep.subr.bf16.mxu0 0
        %344 = vmatpush1.bf16.xpose.msra.mxu0 %v331
        %345 = vmatprep.subr.bf16.mxu0 0
        %346 = vmatpush1.bf16.xpose.msra.mxu0 %v328
        %347 = vmatprep.subr.bf16.mxu0 0
        %348 = vmatpush1.bf16.xpose.msra.mxu0 %v325
        %349 = vmatprep.subr.bf16.mxu0 0
        %350 = vmatpush1.bf16.xpose.msra.mxu0 %v322
        %351 = vmatprep.subr.bf16.mxu0 0
        %352 = vmatpush1.bf16.xpose.msra.mxu0 %v319
        %353 = vmatprep.subr.bf16.mxu0 0
        %354 = vmatpush1.bf16.xpose.msra.mxu0 %v316
        %355 = vmatprep.subr.bf16.mxu0 0
        %356 = vmatpush2.bf16.xpose.msra.mxu0 0
        %357 = vmatprep.subr.bf16.mxu0 0
        %358 = vmatpush2.bf16.xpose.msra.mxu0 0
        %359 = vmatprep.subr.bf16.mxu0 0
        %360 = vmatpush2.bf16.xpose.msra.mxu0 0
        %361 = vmatprep.subr.bf16.mxu0 0
        %362 = vmatpush2.bf16.xpose.msra.mxu0 0
        %363 = vmatprep.subr.bf16.mxu0 0
        %364 = vmatpush2.bf16.xpose.msra.mxu0 0
        %365 = vmatprep.subr.bf16.mxu0 0
        %366 = vmatpush2.bf16.xpose.msra.mxu0 0
        %367 = vmatprep.subr.bf16.mxu0 0
        %368 = vmatpush2.bf16.xpose.msra.mxu0 0
        %369 = vmatprep.subr.bf16.mxu0 0
        %370 = vmatpush2.bf16.xpose.msra.mxu0 0
        %371 = vmatprep.mubr.bf16.mxu0 0
        %372 = vmatmul.mubr.bf16.gmra.mxu0 %v310
        %v373 = vpop.f32.mrf.mxu0
        %v374 = vadd.f32 %v281, %v373
        %v375 = vpop.f32.mrf.mxu0
        %v376 = vpop.f32.mrf.mxu0
        %v377 = vadd.f32 %v286, %v376
        %v378 = vpop.f32.mrf.mxu0
        %379 = vmatprep.mubr.bf16.mxu0 0
        %380 = vmatmul.mubr.bf16.gmra.mxu0 %v313
        %v381 = vpop.f32.mrf.mxu0
        %v382 = vadd.f32 %v291, %v381
        %v383 = vpop.f32.mrf.mxu0
        %v384 = vpop.f32.mrf.mxu0
        %v385 = vadd.f32 %v296, %v384
        %v386 = vpop.f32.mrf.mxu0
        %387 = vdwg.mxu0
        %v388 = vmax.f32 %v374, 0.0
        %v389 = vmax.f32 %v377, 0.0
        %v390 = vmax.f32 %v382, 0.0
        %v391 = vmax.f32 %v385, 0.0
        %v392 = vld [vmem:[%s3] sm:$0x1]
        %s393 = sld [smem:[#allocation2]]
        %v394 = vstv %s393
        %vm395 = vcmask 261120
        %v397 = vsel %vm395, %v392, 0
        %399 = vmatprep.subr.mxu0 0.0
        %400 = vmatpush1.msra.mxu0 0.0
        %401 = vmatprep.subr.mxu0 0.0
        %402 = vmatpush1.msra.mxu0 0.0
        %403 = vmatprep.subr.mxu0 0.0
        %404 = vmatpush1.msra.mxu0 0.0
        %405 = vmatprep.subr.mxu0 0.0
        %406 = vmatpush1.msra.mxu0 0.0
        %407 = vmatprep.subr.mxu0 0.0
        %408 = vmatpush1.msra.mxu0 0.0
        %409 = vmatprep.subr.mxu0 0.0
        %410 = vmatpush1.msra.mxu0 0.0
        %411 = vmatprep.subr.mxu0 0.0
        %412 = vmatpush1.msra.mxu0 0.0
        %413 = vmatprep.subr.mxu0 0.0
        %414 = vmatpush1.msra.mxu0 0.0
        %415 = vmatprep.subr.mxu0 0.0
        %416 = vmatpush1.msra.mxu0 0.0
        %417 = vmatprep.subr.mxu0 0.0
        %418 = vmatpush1.msra.mxu0 0.0
        %419 = vmatprep.subr.mxu0 0.0
        %420 = vmatpush1.msra.mxu0 0.0
        %421 = vmatprep.subr.mxu0 0.0
        %422 = vmatpush1.msra.mxu0 0.0
        %423 = vmatprep.subr.mxu0 0.0
        %424 = vmatpush1.msra.mxu0 %v391
        %425 = vmatprep.subr.mxu0 0.0
        %426 = vmatpush1.msra.mxu0 %v390
        %427 = vmatprep.subr.mxu0 0.0
        %428 = vmatpush1.msra.mxu0 %v389
        %429 = vmatprep.subr.mxu0 0.0
        %430 = vmatpush1.msra.mxu0 %v388
        %431 = vmatprep.subr.mxu0 0.0
        %432 = vmatpush2.msra.mxu0 0.0
        %433 = vmatprep.subr.mxu0 0.0
        %434 = vmatpush2.msra.mxu0 0.0
        %435 = vmatprep.subr.mxu0 0.0
        %436 = vmatpush2.msra.mxu0 0.0
        %437 = vmatprep.subr.mxu0 0.0
        %438 = vmatpush2.msra.mxu0 0.0
        %439 = vmatprep.subr.mxu0 0.0
        %440 = vmatpush2.msra.mxu0 0.0
        %441 = vmatprep.subr.mxu0 0.0
        %442 = vmatpush2.msra.mxu0 0.0
        %443 = vmatprep.subr.mxu0 0.0
        %444 = vmatpush2.msra.mxu0 0.0
        %445 = vmatprep.subr.mxu0 0.0
        %446 = vmatpush2.msra.mxu0 0.0
        %447 = vmatprep.subr.mxu0 0.0
        %448 = vmatpush2.msra.mxu0 0.0
        %449 = vmatprep.subr.mxu0 0.0
        %450 = vmatpush2.msra.mxu0 0.0
        %451 = vmatprep.subr.mxu0 0.0
        %452 = vmatpush2.msra.mxu0 0.0
        %453 = vmatprep.subr.mxu0 0.0
        %454 = vmatpush2.msra.mxu0 0.0
        %455 = vmatprep.subr.mxu0 0.0
        %456 = vmatpush2.msra.mxu0 0.0
        %457 = vmatprep.subr.mxu0 0.0
        %458 = vmatpush2.msra.mxu0 0.0
        %459 = vmatprep.subr.mxu0 0.0
        %460 = vmatpush2.msra.mxu0 0.0
        %461 = vmatprep.subr.mxu0 0.0
        %462 = vmatpush2.msra.mxu0 0.0
        %463 = vmatprep.mubr.f32.mxu0 0.0
        %464 = vmatmul.mubr.f32.gmra.mxu0 %v397
        %v465 = vpop.f32.mrf.mxu0
        %v466 = vadd.f32 %v394, %v465
        %v467 = vpop.f32.mrf.mxu0
        %468 = vdwg.mxu0
        %469 = vst [vmem:[%s230] sm:$0x1] %v466
        %s470 = sand.u32 %s138, 1
        %s471 = scalar_lea.sflag [#allocation4], %s470
        %s472 = sand.u32 %s138, 1
        %s473 = scalar_lea.vmem [#allocation3], %s472
        // Predicated region
        $region41: #{tpu_custom_call.1} parent=39 // pred_check
          %p474 = pneg %p148
        $region42: #{tpu_custom_call.1} parent=39 // pred_check_branch
          %476 = sbr.rel (%p474) target = $region44
        $region43: #{tpu_custom_call.1} parent=39 // pred_region
          %s478 = ssub.s32 16, 16
          %479 = vsyncadd %s471, %s478
          %s480 = smul.addr %s20, 16
          %s481 = scalar_lea.hbm %s5, %s480
          %s483 = sshll.u32 %s473, 4
          %s484 = int_to_ptr.vmem [resolvable:$true] %s483
          %486 = dma.vmem_to_hbm [thread:$0]  %s484, 16, %s481, %s471
        $region44: #{tpu_custom_call.1} parent=39 // pred_fallthru
          _
      $region40: #{tpu_custom_call.1} parent=5 // pred_fallthru
        _
      %p487 = scmp.le.s32.totalorder 2, %s15
      // Predicated region
      $region45: #{tpu_custom_call.1} parent=5 // pred_check
        %p488 = pneg %p487
      $region46: #{tpu_custom_call.1} parent=5 // pred_check_branch
        %490 = sbr.rel (%p488) target = $region48
      $region47: #{tpu_custom_call.1} parent=5 // pred_region
        %s491 = ssub.s32 %s15, 2
        // Predicated region
        $region49: #{tpu_custom_call.1} parent=47 // pred_check
          %p492 = pneg %p154
        $region50: #{tpu_custom_call.1} parent=47 // pred_check_branch
          %494 = sbr.rel (%p492) target = $region52
        $region51: #{tpu_custom_call.1} parent=47 // pred_region
          %s495 = sand.u32 %s139, 1
          %s496 = scalar_lea.sflag [#allocation4], %s495
          %s497 = sand.u32 %s139, 1
          %s498 = scalar_lea.vmem [#allocation3], %s497
          %499 = dma.done %s496, 16
        $region52: #{tpu_custom_call.1} parent=47 // pred_fallthru
          _
      $region48: #{tpu_custom_call.1} parent=5 // pred_fallthru
        _
    $region6: #{tpu_custom_call.1} parent=1 // loop_footer
      %s19 = sadd.s32 1, %s15
    $region7: #{tpu_custom_call.1} parent=1 // loop_footer_branch
      %14 = sbr.rel target = $region3
    $region8: #{tpu_custom_call.1} parent=1 // loop_exit
      _
    %500 = vsyncpa [#allocation4], 1
    %s501 = scalar_lea.sflag [#allocation4], 1
    %502 = vsyncpa %s501, 1

</llo_original>
